<compile_context>
chip_gen: v7x
topology: tpu7x:2x2x1
jax: 0.10.0
libtpu: 0.0.40
codegen_flags: <defaults>
</compile_context>

<pallas_src>
import math

import jax
import jax.numpy as jnp
from jax.experimental import pallas as pl
from jax.experimental.pallas import tpu as pltpu

_LANES = 128
_N_STREAMS = 7


# ----------------------------- Pallas kernel --------------------------------
def _residual_add_kernel(*refs):
    # refs = 7 ff-branch tiles, then 7 skip-branch tiles, then 7 output tiles.
    ff_refs = refs[:_N_STREAMS]
    x_refs = refs[_N_STREAMS:2 * _N_STREAMS]
    o_refs = refs[2 * _N_STREAMS:]
    # Static Python loop over the 7 streams (unrolled at trace time).
    for ff, x, o in zip(ff_refs, x_refs, o_refs):
        o[...] = ff[...] + x[...]


def residual_add_pallas(ff_streams, skip_streams, *, max_tile_rows=1024):
    """out_i = ff_streams[i] + skip_streams[i] for all 7 streams, one kernel."""
    assert len(ff_streams) == _N_STREAMS and len(skip_streams) == _N_STREAMS
    shape = skip_streams[0].shape
    total = math.prod(shape)
    out_dtypes = tuple(jnp.promote_types(a.dtype, b.dtype)
                       for a, b in zip(ff_streams, skip_streams))

    # Lane-dense 2-D view: (rows, 128).  The reshape is free (contiguous) when
    # `total` is a multiple of 128; only a ragged tail pays for a one-time pad.
    padded = pl.cdiv(total, _LANES) * _LANES
    rows = padded // _LANES

    def to2d(a):
        flat = a.reshape(-1)
        if padded != total:
            flat = jnp.pad(flat, (0, padded - total))
        return flat.reshape(rows, _LANES)

    ins = [to2d(a) for a in ff_streams] + [to2d(a) for a in skip_streams]

    if rows <= max_tile_rows:
        # Single block equal to the full array dims (exempt from the (8,128)
        # divisibility rule).
        tile_rows = rows
    else:
        tile_rows = max_tile_rows            # multiple of 8; 512 KiB f32 block
    grid = (pl.cdiv(rows, tile_rows),)       # ragged tail handled by Pallas masking

    spec = pl.BlockSpec((tile_rows, _LANES), lambda i: (i, 0))
    in_specs = [spec] * (2 * _N_STREAMS)
    out_specs = [spec] * _N_STREAMS
    out_shape = tuple(jax.ShapeDtypeStruct((rows, _LANES), dt) for dt in out_dtypes)

    # VMEM budget: (14 inputs + 7 outputs) x 2 buffers x block bytes (+ headroom).
    all_dtypes = [a.dtype for a in ins] + list(out_dtypes)
    block_bytes_total = sum(tile_rows * _LANES * jnp.dtype(dt).itemsize
                            for dt in all_dtypes)
    vmem_limit = int(min(max(2 * block_bytes_total + (4 << 20), 16 << 20),
                         48 << 20))          # stays below v7x's 64 MiB VMEM

    outs = pl.pallas_call(
        _residual_add_kernel,
        out_shape=out_shape,
        grid_spec=pltpu.PrefetchScalarGridSpec(
            num_scalar_prefetch=0,
            grid=grid,
            in_specs=in_specs,
            out_specs=out_specs,
        ),
        compiler_params=pltpu.CompilerParams(
            dimension_semantics=("parallel",),   # shards tiles across v7x's 2 TCs
            vmem_limit_bytes=vmem_limit,
        ),
    )(*ins)

    def from2d(a2d):
        flat = a2d.reshape(-1)
        if padded != total:
            flat = flat[:total]
        return flat.reshape(shape)

    return tuple(from2d(o) for o in outs)


# ----------------------------- Residual ---------------------------------------
def residual(fn, x, x_delta, x_theta, x_alpha, x_beta, x_gamma, x_upper, **kwargs):
    """JAX/Pallas equivalent of Residual.forward."""
    skips = (x, x_delta, x_theta, x_alpha, x_beta, x_gamma, x_upper)
    (x_ff, x_delta_ff, x_theta_ff, x_alpha_ff,
     x_beta_ff, x_gamma_ff, x_upper_ff) = fn(*skips, **kwargs)
    ffs = (x_ff, x_delta_ff, x_theta_ff, x_alpha_ff,
           x_beta_ff, x_gamma_ff, x_upper_ff)
    return residual_add_pallas(ffs, skips)


# `fn` is an externally supplied sub-module (e.g. PreNorm-wrapped attention/FF).
# TODO(synk): the real `fn` lives in a separate module; this stand-in only
# matches the 7-in / 7-out arity and shapes expected by Residual.
def default_fn(*streams):
    return tuple(jnp.tanh(s) * (0.5 + 0.1 * i) for i, s in enumerate(streams))


# ----------------------------- main -------------------------------------------
if __name__ == "__main__":
    B, N, D = 2, 8, 32
    key = jax.random.PRNGKey(0)
    keys = jax.random.split(key, _N_STREAMS)
    streams = [jax.random.normal(k, (B, N, D), dtype=jnp.float32) for k in keys]

    outs = residual(default_fn, *streams)
    outs = jax.block_until_ready(outs)

    # Reference check: out_i == fn(x...)_i + x_i.
    ff_ref = default_fn(*streams)
    for o, f, s in zip(outs, ff_ref, streams):
        assert o.shape == s.shape and o.dtype == s.dtype
        assert jnp.max(jnp.abs(o - (f + s))) < 1e-6, "Residual mismatch"

    print("KERNEL_OK")
</pallas_src>

<mosaic_0001>
module attributes {stable_mosaic.version = 11 : i64} {
  func.func @_residual_add_kernel(%arg0: i32, %arg1: memref<4x128xf32, #tpu.memory_space<vmem>>, %arg2: memref<4x128xf32, #tpu.memory_space<vmem>>, %arg3: memref<4x128xf32, #tpu.memory_space<vmem>>, %arg4: memref<4x128xf32, #tpu.memory_space<vmem>>, %arg5: memref<4x128xf32, #tpu.memory_space<vmem>>, %arg6: memref<4x128xf32, #tpu.memory_space<vmem>>, %arg7: memref<4x128xf32, #tpu.memory_space<vmem>>, %arg8: memref<4x128xf32, #tpu.memory_space<vmem>>, %arg9: memref<4x128xf32, #tpu.memory_space<vmem>>, %arg10: memref<4x128xf32, #tpu.memory_space<vmem>>, %arg11: memref<4x128xf32, #tpu.memory_space<vmem>>, %arg12: memref<4x128xf32, #tpu.memory_space<vmem>>, %arg13: memref<4x128xf32, #tpu.memory_space<vmem>>, %arg14: memref<4x128xf32, #tpu.memory_space<vmem>>, %arg15: memref<4x128xf32, #tpu.memory_space<vmem>>, %arg16: memref<4x128xf32, #tpu.memory_space<vmem>>, %arg17: memref<4x128xf32, #tpu.memory_space<vmem>>, %arg18: memref<4x128xf32, #tpu.memory_space<vmem>>, %arg19: memref<4x128xf32, #tpu.memory_space<vmem>>, %arg20: memref<4x128xf32, #tpu.memory_space<vmem>>, %arg21: memref<4x128xf32, #tpu.memory_space<vmem>>) attributes {dimension_semantics = [#tpu.dimension_semantics<parallel>], iteration_bounds = array<i64: 1>, scalar_prefetch = 0 : i64, scratch_operands = 0 : i64, tpu.core_type = #tpu.core_type<tc>, window_params = [{transform_indices = @transform_0, window_bounds = array<i64: 4, 128>}, {transform_indices = @transform_1, window_bounds = array<i64: 4, 128>}, {transform_indices = @transform_2, window_bounds = array<i64: 4, 128>}, {transform_indices = @transform_3, window_bounds = array<i64: 4, 128>}, {transform_indices = @transform_4, window_bounds = array<i64: 4, 128>}, {transform_indices = @transform_5, window_bounds = array<i64: 4, 128>}, {transform_indices = @transform_6, window_bounds = array<i64: 4, 128>}, {transform_indices = @transform_7, window_bounds = array<i64: 4, 128>}, {transform_indices = @transform_8, window_bounds = array<i64: 4, 128>}, {transform_indices = @transform_9, window_bounds = array<i64: 4, 128>}, {transform_indices = @transform_10, window_bounds = array<i64: 4, 128>}, {transform_indices = @transform_11, window_bounds = array<i64: 4, 128>}, {transform_indices = @transform_12, window_bounds = array<i64: 4, 128>}, {transform_indices = @transform_13, window_bounds = array<i64: 4, 128>}, {transform_indices = @transform_14, window_bounds = array<i64: 4, 128>}, {transform_indices = @transform_15, window_bounds = array<i64: 4, 128>}, {transform_indices = @transform_16, window_bounds = array<i64: 4, 128>}, {transform_indices = @transform_17, window_bounds = array<i64: 4, 128>}, {transform_indices = @transform_18, window_bounds = array<i64: 4, 128>}, {transform_indices = @transform_19, window_bounds = array<i64: 4, 128>}, {transform_indices = @transform_20, window_bounds = array<i64: 4, 128>}]} {
    %c0 = arith.constant 0 : index
    %c0_0 = arith.constant 0 : index
    %0 = vector.load %arg1[%c0, %c0_0] : memref<4x128xf32, #tpu.memory_space<vmem>>, vector<4x128xf32>
    %c0_1 = arith.constant 0 : index
    %c0_2 = arith.constant 0 : index
    %1 = vector.load %arg8[%c0_1, %c0_2] : memref<4x128xf32, #tpu.memory_space<vmem>>, vector<4x128xf32>
    %2 = arith.addf %0, %1 : vector<4x128xf32>
    %c0_3 = arith.constant 0 : index
    %c0_4 = arith.constant 0 : index
    %3 = vector.load %arg15[%c0_3, %c0_4] : memref<4x128xf32, #tpu.memory_space<vmem>>, vector<4x128xf32>
    tpu.vector_store %arg15[%c0_3, %c0_4], %2 {strides = array<i32>} : memref<4x128xf32, #tpu.memory_space<vmem>>, vector<4x128xf32>,
    %c0_5 = arith.constant 0 : index
    %c0_6 = arith.constant 0 : index
    %4 = vector.load %arg2[%c0_5, %c0_6] : memref<4x128xf32, #tpu.memory_space<vmem>>, vector<4x128xf32>
    %c0_7 = arith.constant 0 : index
    %c0_8 = arith.constant 0 : index
    %5 = vector.load %arg9[%c0_7, %c0_8] : memref<4x128xf32, #tpu.memory_space<vmem>>, vector<4x128xf32>
    %6 = arith.addf %4, %5 : vector<4x128xf32>
    %c0_9 = arith.constant 0 : index
    %c0_10 = arith.constant 0 : index
    %7 = vector.load %arg16[%c0_9, %c0_10] : memref<4x128xf32, #tpu.memory_space<vmem>>, vector<4x128xf32>
    tpu.vector_store %arg16[%c0_9, %c0_10], %6 {strides = array<i32>} : memref<4x128xf32, #tpu.memory_space<vmem>>, vector<4x128xf32>,
    %c0_11 = arith.constant 0 : index
    %c0_12 = arith.constant 0 : index
    %8 = vector.load %arg3[%c0_11, %c0_12] : memref<4x128xf32, #tpu.memory_space<vmem>>, vector<4x128xf32>
    %c0_13 = arith.constant 0 : index
    %c0_14 = arith.constant 0 : index
    %9 = vector.load %arg10[%c0_13, %c0_14] : memref<4x128xf32, #tpu.memory_space<vmem>>, vector<4x128xf32>
    %10 = arith.addf %8, %9 : vector<4x128xf32>
    %c0_15 = arith.constant 0 : index
    %c0_16 = arith.constant 0 : index
    %11 = vector.load %arg17[%c0_15, %c0_16] : memref<4x128xf32, #tpu.memory_space<vmem>>, vector<4x128xf32>
    tpu.vector_store %arg17[%c0_15, %c0_16], %10 {strides = array<i32>} : memref<4x128xf32, #tpu.memory_space<vmem>>, vector<4x128xf32>,
    %c0_17 = arith.constant 0 : index
    %c0_18 = arith.constant 0 : index
    %12 = vector.load %arg4[%c0_17, %c0_18] : memref<4x128xf32, #tpu.memory_space<vmem>>, vector<4x128xf32>
    %c0_19 = arith.constant 0 : index
    %c0_20 = arith.constant 0 : index
    %13 = vector.load %arg11[%c0_19, %c0_20] : memref<4x128xf32, #tpu.memory_space<vmem>>, vector<4x128xf32>
    %14 = arith.addf %12, %13 : vector<4x128xf32>
    %c0_21 = arith.constant 0 : index
    %c0_22 = arith.constant 0 : index
    %15 = vector.load %arg18[%c0_21, %c0_22] : memref<4x128xf32, #tpu.memory_space<vmem>>, vector<4x128xf32>
    tpu.vector_store %arg18[%c0_21, %c0_22], %14 {strides = array<i32>} : memref<4x128xf32, #tpu.memory_space<vmem>>, vector<4x128xf32>,
    %c0_23 = arith.constant 0 : index
    %c0_24 = arith.constant 0 : index
    %16 = vector.load %arg5[%c0_23, %c0_24] : memref<4x128xf32, #tpu.memory_space<vmem>>, vector<4x128xf32>
    %c0_25 = arith.constant 0 : index
    %c0_26 = arith.constant 0 : index
    %17 = vector.load %arg12[%c0_25, %c0_26] : memref<4x128xf32, #tpu.memory_space<vmem>>, vector<4x128xf32>
    %18 = arith.addf %16, %17 : vector<4x128xf32>
    %c0_27 = arith.constant 0 : index
    %c0_28 = arith.constant 0 : index
    %19 = vector.load %arg19[%c0_27, %c0_28] : memref<4x128xf32, #tpu.memory_space<vmem>>, vector<4x128xf32>
    tpu.vector_store %arg19[%c0_27, %c0_28], %18 {strides = array<i32>} : memref<4x128xf32, #tpu.memory_space<vmem>>, vector<4x128xf32>,
    %c0_29 = arith.constant 0 : index
    %c0_30 = arith.constant 0 : index
    %20 = vector.load %arg6[%c0_29, %c0_30] : memref<4x128xf32, #tpu.memory_space<vmem>>, vector<4x128xf32>
    %c0_31 = arith.constant 0 : index
    %c0_32 = arith.constant 0 : index
    %21 = vector.load %arg13[%c0_31, %c0_32] : memref<4x128xf32, #tpu.memory_space<vmem>>, vector<4x128xf32>
    %22 = arith.addf %20, %21 : vector<4x128xf32>
    %c0_33 = arith.constant 0 : index
    %c0_34 = arith.constant 0 : index
    %23 = vector.load %arg20[%c0_33, %c0_34] : memref<4x128xf32, #tpu.memory_space<vmem>>, vector<4x128xf32>
    tpu.vector_store %arg20[%c0_33, %c0_34], %22 {strides = array<i32>} : memref<4x128xf32, #tpu.memory_space<vmem>>, vector<4x128xf32>,
    %c0_35 = arith.constant 0 : index
    %c0_36 = arith.constant 0 : index
    %24 = vector.load %arg7[%c0_35, %c0_36] : memref<4x128xf32, #tpu.memory_space<vmem>>, vector<4x128xf32>
    %c0_37 = arith.constant 0 : index
    %c0_38 = arith.constant 0 : index
    %25 = vector.load %arg14[%c0_37, %c0_38] : memref<4x128xf32, #tpu.memory_space<vmem>>, vector<4x128xf32>
    %26 = arith.addf %24, %25 : vector<4x128xf32>
    %c0_39 = arith.constant 0 : index
    %c0_40 = arith.constant 0 : index
    %27 = vector.load %arg21[%c0_39, %c0_40] : memref<4x128xf32, #tpu.memory_space<vmem>>, vector<4x128xf32>
    tpu.vector_store %arg21[%c0_39, %c0_40], %26 {strides = array<i32>} : memref<4x128xf32, #tpu.memory_space<vmem>>, vector<4x128xf32>,
    return
  }
  func.func @transform_0(%arg0: i32) -> (i32, i32) {
    %c0_i32 = arith.constant 0 : i32
    %c0_i32_0 = arith.constant 0 : i32
    return %arg0, %c0_i32 : i32, i32
  }
  func.func @transform_1(%arg0: i32) -> (i32, i32) {
    %c0_i32 = arith.constant 0 : i32
    %c0_i32_0 = arith.constant 0 : i32
    return %arg0, %c0_i32 : i32, i32
  }
  func.func @transform_2(%arg0: i32) -> (i32, i32) {
    %c0_i32 = arith.constant 0 : i32
    %c0_i32_0 = arith.constant 0 : i32
    return %arg0, %c0_i32 : i32, i32
  }
  func.func @transform_3(%arg0: i32) -> (i32, i32) {
    %c0_i32 = arith.constant 0 : i32
    %c0_i32_0 = arith.constant 0 : i32
    return %arg0, %c0_i32 : i32, i32
  }
  func.func @transform_4(%arg0: i32) -> (i32, i32) {
    %c0_i32 = arith.constant 0 : i32
    %c0_i32_0 = arith.constant 0 : i32
    return %arg0, %c0_i32 : i32, i32
  }
  func.func @transform_5(%arg0: i32) -> (i32, i32) {
    %c0_i32 = arith.constant 0 : i32
    %c0_i32_0 = arith.constant 0 : i32
    return %arg0, %c0_i32 : i32, i32
  }
  func.func @transform_6(%arg0: i32) -> (i32, i32) {
    %c0_i32 = arith.constant 0 : i32
    %c0_i32_0 = arith.constant 0 : i32
    return %arg0, %c0_i32 : i32, i32
  }
  func.func @transform_7(%arg0: i32) -> (i32, i32) {
    %c0_i32 = arith.constant 0 : i32
    %c0_i32_0 = arith.constant 0 : i32
    return %arg0, %c0_i32 : i32, i32
  }
  func.func @transform_8(%arg0: i32) -> (i32, i32) {
    %c0_i32 = arith.constant 0 : i32
    %c0_i32_0 = arith.constant 0 : i32
    return %arg0, %c0_i32 : i32, i32
  }
  func.func @transform_9(%arg0: i32) -> (i32, i32) {
    %c0_i32 = arith.constant 0 : i32
    %c0_i32_0 = arith.constant 0 : i32
    return %arg0, %c0_i32 : i32, i32
  }
  func.func @transform_10(%arg0: i32) -> (i32, i32) {
    %c0_i32 = arith.constant 0 : i32
    %c0_i32_0 = arith.constant 0 : i32
    return %arg0, %c0_i32 : i32, i32
  }
  func.func @transform_11(%arg0: i32) -> (i32, i32) {
    %c0_i32 = arith.constant 0 : i32
    %c0_i32_0 = arith.constant 0 : i32
    return %arg0, %c0_i32 : i32, i32
  }
  func.func @transform_12(%arg0: i32) -> (i32, i32) {
    %c0_i32 = arith.constant 0 : i32
    %c0_i32_0 = arith.constant 0 : i32
    return %arg0, %c0_i32 : i32, i32
  }
  func.func @transform_13(%arg0: i32) -> (i32, i32) {
    %c0_i32 = arith.constant 0 : i32
    %c0_i32_0 = arith.constant 0 : i32
    return %arg0, %c0_i32 : i32, i32
  }
  func.func @transform_14(%arg0: i32) -> (i32, i32) {
    %c0_i32 = arith.constant 0 : i32
    %c0_i32_0 = arith.constant 0 : i32
    return %arg0, %c0_i32 : i32, i32
  }
  func.func @transform_15(%arg0: i32) -> (i32, i32) {
    %c0_i32 = arith.constant 0 : i32
    %c0_i32_0 = arith.constant 0 : i32
    return %arg0, %c0_i32 : i32, i32
  }
  func.func @transform_16(%arg0: i32) -> (i32, i32) {
    %c0_i32 = arith.constant 0 : i32
    %c0_i32_0 = arith.constant 0 : i32
    return %arg0, %c0_i32 : i32, i32
  }
  func.func @transform_17(%arg0: i32) -> (i32, i32) {
    %c0_i32 = arith.constant 0 : i32
    %c0_i32_0 = arith.constant 0 : i32
    return %arg0, %c0_i32 : i32, i32
  }
  func.func @transform_18(%arg0: i32) -> (i32, i32) {
    %c0_i32 = arith.constant 0 : i32
    %c0_i32_0 = arith.constant 0 : i32
    return %arg0, %c0_i32 : i32, i32
  }
  func.func @transform_19(%arg0: i32) -> (i32, i32) {
    %c0_i32 = arith.constant 0 : i32
    %c0_i32_0 = arith.constant 0 : i32
    return %arg0, %c0_i32 : i32, i32
  }
  func.func @transform_20(%arg0: i32) -> (i32, i32) {
    %c0_i32 = arith.constant 0 : i32
    %c0_i32_0 = arith.constant 0 : i32
    return %arg0, %c0_i32 : i32, i32
  }
}

</mosaic_0001>

<llo_original>
// kernel: tpu_custom_call.1
$region0: #{tpu_custom_call.1}
  #allocation0 [shape = 'u32[]', space=smem, size = 0x4, offset = 0x4, fixed_abs, tag = 'smem constant byte address 0x4 - core index']
  #allocation1 [shape = 'u32[144,128]{1,0:T(1,128)}', space=vmem, size = 0x12000, scoped, tag = 'internal scratch']
  %s0 = inlined_call_operand.hbm [shape: f32[4,128], index: 0, kind: input, shape index: {}]
  %s1 = inlined_call_operand.hbm [shape: f32[4,128], index: 1, kind: input, shape index: {}]
  %s2 = inlined_call_operand.vmem [shape: f32[4,128], index: 2, kind: input, shape index: {}]
  %s3 = inlined_call_operand.vmem [shape: f32[4,128], index: 3, kind: input, shape index: {}]
  %s4 = inlined_call_operand.vmem [shape: f32[4,128], index: 4, kind: input, shape index: {}]
  %s5 = inlined_call_operand.vmem [shape: f32[4,128], index: 5, kind: input, shape index: {}]
  %s6 = inlined_call_operand.vmem [shape: f32[4,128], index: 6, kind: input, shape index: {}]
  %s7 = inlined_call_operand.vmem [shape: f32[4,128], index: 7, kind: input, shape index: {}]
  %s8 = inlined_call_operand.vmem [shape: f32[4,128], index: 8, kind: input, shape index: {}]
  %s9 = inlined_call_operand.vmem [shape: f32[4,128], index: 9, kind: input, shape index: {}]
  %s10 = inlined_call_operand.vmem [shape: f32[4,128], index: 10, kind: input, shape index: {}]
  %s11 = inlined_call_operand.vmem [shape: f32[4,128], index: 11, kind: input, shape index: {}]
  %s12 = inlined_call_operand.vmem [shape: f32[4,128], index: 12, kind: input, shape index: {}]
  %s13 = inlined_call_operand.vmem [shape: f32[4,128], index: 13, kind: input, shape index: {}]
  %s14 = inlined_call_operand.hbm [shape: f32[4,128], index: 14, kind: output, shape index: {0}]
  %s15 = inlined_call_operand.hbm [shape: f32[4,128], index: 15, kind: output, shape index: {1}]
  %s16 = inlined_call_operand.hbm [shape: f32[4,128], index: 16, kind: output, shape index: {2}]
  %s17 = inlined_call_operand.hbm [shape: f32[4,128], index: 17, kind: output, shape index: {3}]
  %s18 = inlined_call_operand.hbm [shape: f32[4,128], index: 18, kind: output, shape index: {4}]
  %s19 = inlined_call_operand.hbm [shape: f32[4,128], index: 19, kind: output, shape index: {5}]
  %s20 = inlined_call_operand.hbm [shape: f32[4,128], index: 20, kind: output, shape index: {6}]
  %21 = xla_tuple %s14, %s15, %s16, %s17, %s18, %s19, %s20
  %s22 = sld [smem:[#allocation0]]
  $region122: #{tpu_custom_call.1} parent=0
    _
  %s24 = ssub.s32 1, %s22
  %s25 = scalar_select 0, %s24, %s22
  $region1: #{tpu_custom_call.1} parent=0
    #allocation2 [shape = 'u8[2048]{0}', space=vmem, size = 0x800, scoped, tag = 'input window, operand 0, single buffered']
    #allocation3 [shape = 's32[1]{0}', space=sflag, size = 0x4, scoped, tag = 'scoped memory for tpu_custom_call.1']
    #allocation4 [shape = 's32[1]{0}', space=sflag, size = 0x4, scoped, tag = 'scoped memory for tpu_custom_call.1']
    #allocation5 [shape = 'u8[2048]{0}', space=vmem, size = 0x800, scoped, tag = 'input window, operand 1, single buffered']
    #allocation6 [shape = 's32[1]{0}', space=sflag, size = 0x4, scoped, tag = 'scoped memory for tpu_custom_call.1']
    #allocation7 [shape = 'u8[2048]{0}', space=vmem, size = 0x800, scoped, tag = 'output window, operand 0, single buffered']
    #allocation8 [shape = 'u8[2048]{0}', space=vmem, size = 0x800, scoped, tag = 'output window, operand 1, single buffered']
    #allocation9 [shape = 's32[1]{0}', space=sflag, size = 0x4, scoped, tag = 'scoped memory for tpu_custom_call.1']
    #allocation10 [shape = 'u8[2048]{0}', space=vmem, size = 0x800, scoped, tag = 'output window, operand 2, single buffered']
    #allocation11 [shape = 'u8[2048]{0}', space=vmem, size = 0x800, scoped, tag = 'output window, operand 3, single buffered']
    #allocation12 [shape = 's32[1]{0}', space=sflag, size = 0x4, scoped, tag = 'scoped memory for tpu_custom_call.1']
    #allocation13 [shape = 'u8[2048]{0}', space=vmem, size = 0x800, scoped, tag = 'output window, operand 4, single buffered']
    #allocation14 [shape = 'u8[2048]{0}', space=vmem, size = 0x800, scoped, tag = 'output window, operand 5, single buffered']
    #allocation15 [shape = 's32[1]{0}', space=sflag, size = 0x4, scoped, tag = 'scoped memory for tpu_custom_call.1']
    #allocation16 [shape = 'u8[2048]{0}', space=vmem, size = 0x800, scoped, tag = 'output window, operand 6, single buffered']
    %26 = vsyncpa [#allocation3], 0
    %27 = vsyncpa [#allocation6], 0
    %28 = vsyncpa [#allocation4], 0
    %29 = vsyncpa [#allocation9], 0
    %30 = vsyncpa [#allocation12], 0
    %31 = vsyncpa [#allocation15], 0
    // Predicated region
    $region2: #{tpu_custom_call.1} parent=1 // pred_check
      _
    $region3: #{tpu_custom_call.1} parent=1 // pred_check_branch
      %33 = sbr.rel (0) target = $region5
    $region4: #{tpu_custom_call.1} parent=1 // pred_region
      %s35 = ssub.s32 64, 64
      %36 = vsyncadd [#allocation3], %s35
      %s38 = sshll.u32 [#allocation2], 4
      %s39 = int_to_ptr.vmem [resolvable:$true] %s38
      %41 = dma.hbm_to_vmem [thread:$0]  %s0, 64, %s39, [#allocation3]
    $region5: #{tpu_custom_call.1} parent=1 // pred_fallthru
      _
    // Predicated region
    $region6: #{tpu_custom_call.1} parent=1 // pred_check
      _
    $region7: #{tpu_custom_call.1} parent=1 // pred_check_branch
      %43 = sbr.rel (0) target = $region9
    $region8: #{tpu_custom_call.1} parent=1 // pred_region
      %s45 = ssub.s32 64, 64
      %46 = vsyncadd [#allocation6], %s45
      %s48 = sshll.u32 [#allocation5], 4
      %s49 = int_to_ptr.vmem [resolvable:$true] %s48
      %51 = dma.hbm_to_vmem [thread:$0]  %s1, 64, %s49, [#allocation6]
    $region9: #{tpu_custom_call.1} parent=1 // pred_fallthru
      _
    // Predicated region
    $region10: #{tpu_custom_call.1} parent=1 // pred_check
      _
    $region11: #{tpu_custom_call.1} parent=1 // pred_check_branch
      %53 = sbr.rel (0) target = $region13
    $region12: #{tpu_custom_call.1} parent=1 // pred_region
      _
    $region13: #{tpu_custom_call.1} parent=1 // pred_fallthru
      _
    // Predicated region
    $region14: #{tpu_custom_call.1} parent=1 // pred_check
      _
    $region15: #{tpu_custom_call.1} parent=1 // pred_check_branch
      %55 = sbr.rel (0) target = $region17
    $region16: #{tpu_custom_call.1} parent=1 // pred_region
      _
    $region17: #{tpu_custom_call.1} parent=1 // pred_fallthru
      _
    // Predicated region
    $region18: #{tpu_custom_call.1} parent=1 // pred_check
      _
    $region19: #{tpu_custom_call.1} parent=1 // pred_check_branch
      %57 = sbr.rel (0) target = $region21
    $region20: #{tpu_custom_call.1} parent=1 // pred_region
      _
    $region21: #{tpu_custom_call.1} parent=1 // pred_fallthru
      _
    // Predicated region
    $region22: #{tpu_custom_call.1} parent=1 // pred_check
      _
    $region23: #{tpu_custom_call.1} parent=1 // pred_check_branch
      %59 = sbr.rel (0) target = $region25
    $region24: #{tpu_custom_call.1} parent=1 // pred_region
      _
    $region25: #{tpu_custom_call.1} parent=1 // pred_fallthru
      _
    // Predicated region
    $region26: #{tpu_custom_call.1} parent=1 // pred_check
      _
    $region27: #{tpu_custom_call.1} parent=1 // pred_check_branch
      %61 = sbr.rel (0) target = $region29
    $region28: #{tpu_custom_call.1} parent=1 // pred_region
      _
    $region29: #{tpu_custom_call.1} parent=1 // pred_fallthru
      _
    // Predicated region
    $region30: #{tpu_custom_call.1} parent=1 // pred_check
      _
    $region31: #{tpu_custom_call.1} parent=1 // pred_check_branch
      %63 = sbr.rel (0) target = $region33
    $region32: #{tpu_custom_call.1} parent=1 // pred_region
      _
    $region33: #{tpu_custom_call.1} parent=1 // pred_fallthru
      _
    // Predicated region
    $region34: #{tpu_custom_call.1} parent=1 // pred_check
      _
    $region35: #{tpu_custom_call.1} parent=1 // pred_check_branch
      %65 = sbr.rel (0) target = $region37
    $region36: #{tpu_custom_call.1} parent=1 // pred_region
      _
    $region37: #{tpu_custom_call.1} parent=1 // pred_fallthru
      _
    // Predicated region
    $region38: #{tpu_custom_call.1} parent=1 // pred_check
      _
    $region39: #{tpu_custom_call.1} parent=1 // pred_check_branch
      %67 = sbr.rel (0) target = $region41
    $region40: #{tpu_custom_call.1} parent=1 // pred_region
      _
    $region41: #{tpu_custom_call.1} parent=1 // pred_fallthru
      _
    // Predicated region
    $region42: #{tpu_custom_call.1} parent=1 // pred_check
      _
    $region43: #{tpu_custom_call.1} parent=1 // pred_check_branch
      %69 = sbr.rel (0) target = $region45
    $region44: #{tpu_custom_call.1} parent=1 // pred_region
      _
    $region45: #{tpu_custom_call.1} parent=1 // pred_fallthru
      _
    // Predicated region
    $region46: #{tpu_custom_call.1} parent=1 // pred_check
      _
    $region47: #{tpu_custom_call.1} parent=1 // pred_check_branch
      %71 = sbr.rel (0) target = $region49
    $region48: #{tpu_custom_call.1} parent=1 // pred_region
      _
    $region49: #{tpu_custom_call.1} parent=1 // pred_fallthru
      _
    // Predicated region
    $region50: #{tpu_custom_call.1} parent=1 // pred_check
      _
    $region51: #{tpu_custom_call.1} parent=1 // pred_check_branch
      %73 = sbr.rel (0) target = $region53
    $region52: #{tpu_custom_call.1} parent=1 // pred_region
      _
    $region53: #{tpu_custom_call.1} parent=1 // pred_fallthru
      _
    // Predicated region
    $region54: #{tpu_custom_call.1} parent=1 // pred_check
      _
    $region55: #{tpu_custom_call.1} parent=1 // pred_check_branch
      %75 = sbr.rel (0) target = $region57
    $region56: #{tpu_custom_call.1} parent=1 // pred_region
      _
    $region57: #{tpu_custom_call.1} parent=1 // pred_fallthru
      _
    // Predicated region
    $region58: #{tpu_custom_call.1} parent=1 // pred_check
      _
    $region59: #{tpu_custom_call.1} parent=1 // pred_check_branch
      %77 = sbr.rel (0) target = $region61
    $region60: #{tpu_custom_call.1} parent=1 // pred_region
      %78 = dma.done [#allocation3], 64
    $region61: #{tpu_custom_call.1} parent=1 // pred_fallthru
      _
    // Predicated region
    $region62: #{tpu_custom_call.1} parent=1 // pred_check
      _
    $region63: #{tpu_custom_call.1} parent=1 // pred_check_branch
      %80 = sbr.rel (0) target = $region65
    $region64: #{tpu_custom_call.1} parent=1 // pred_region
      %81 = dma.done [#allocation6], 64
    $region65: #{tpu_custom_call.1} parent=1 // pred_fallthru
      _
    %v82 = vld [vmem:[#allocation2] sm:$0xf]
    %v83 = vld [vmem:[%s7] sm:$0xf]
    %v84 = vadd.f32 %v82, %v83
    %85 = vst [vmem:[#allocation7] sm:$0xf] %v84
    %v86 = vld [vmem:[#allocation5] sm:$0xf]
    %v87 = vld [vmem:[%s8] sm:$0xf]
    %v88 = vadd.f32 %v86, %v87
    %89 = vst [vmem:[#allocation8] sm:$0xf] %v88
    %v90 = vld [vmem:[%s2] sm:$0xf]
    %v91 = vld [vmem:[%s9] sm:$0xf]
    %v92 = vadd.f32 %v90, %v91
    %93 = vst [vmem:[#allocation10] sm:$0xf] %v92
    %v94 = vld [vmem:[%s3] sm:$0xf]
    %v95 = vld [vmem:[%s10] sm:$0xf]
    %v96 = vadd.f32 %v94, %v95
    %97 = vst [vmem:[#allocation11] sm:$0xf] %v96
    %v98 = vld [vmem:[%s4] sm:$0xf]
    %v99 = vld [vmem:[%s11] sm:$0xf]
    %v100 = vadd.f32 %v98, %v99
    %101 = vst [vmem:[#allocation13] sm:$0xf] %v100
    %v102 = vld [vmem:[%s5] sm:$0xf]
    %v103 = vld [vmem:[%s12] sm:$0xf]
    %v104 = vadd.f32 %v102, %v103
    %105 = vst [vmem:[#allocation14] sm:$0xf] %v104
    %v106 = vld [vmem:[%s6] sm:$0xf]
    %v107 = vld [vmem:[%s13] sm:$0xf]
    %v108 = vadd.f32 %v106, %v107
    %109 = vst [vmem:[#allocation16] sm:$0xf] %v108
    // Predicated region
    $region66: #{tpu_custom_call.1} parent=1 // pred_check
      _
    $region67: #{tpu_custom_call.1} parent=1 // pred_check_branch
      %111 = sbr.rel (0) target = $region69
    $region68: #{tpu_custom_call.1} parent=1 // pred_region
      %s113 = ssub.s32 64, 64
      %114 = vsyncadd [#allocation4], %s113
      %s116 = sshll.u32 [#allocation7], 4
      %s117 = int_to_ptr.vmem [resolvable:$true] %s116
      %119 = dma.vmem_to_hbm [thread:$0]  %s117, 64, %s14, [#allocation4]
    $region69: #{tpu_custom_call.1} parent=1 // pred_fallthru
      _
    // Predicated region
    $region70: #{tpu_custom_call.1} parent=1 // pred_check
      _
    $region71: #{tpu_custom_call.1} parent=1 // pred_check_branch
      %121 = sbr.rel (0) target = $region73
    $region72: #{tpu_custom_call.1} parent=1 // pred_region
      %s123 = ssub.s32 64, 64
      %124 = vsyncadd [#allocation9], %s123
      %s126 = sshll.u32 [#allocation8], 4
      %s127 = int_to_ptr.vmem [resolvable:$true] %s126
      %129 = dma.vmem_to_hbm [thread:$0]  %s127, 64, %s15, [#allocation9]
    $region73: #{tpu_custom_call.1} parent=1 // pred_fallthru
      _
    // Predicated region
    $region74: #{tpu_custom_call.1} parent=1 // pred_check
      _
    $region75: #{tpu_custom_call.1} parent=1 // pred_check_branch
      %131 = sbr.rel (0) target = $region77
    $region76: #{tpu_custom_call.1} parent=1 // pred_region
      %s133 = ssub.s32 64, 64
      %134 = vsyncadd [#allocation9], %s133
      %s136 = sshll.u32 [#allocation10], 4
      %s137 = int_to_ptr.vmem [resolvable:$true] %s136
      %139 = dma.vmem_to_hbm [thread:$0]  %s137, 64, %s16, [#allocation9]
    $region77: #{tpu_custom_call.1} parent=1 // pred_fallthru
      _
    // Predicated region
    $region78: #{tpu_custom_call.1} parent=1 // pred_check
      _
    $region79: #{tpu_custom_call.1} parent=1 // pred_check_branch
      %141 = sbr.rel (0) target = $region81
    $region80: #{tpu_custom_call.1} parent=1 // pred_region
      %s143 = ssub.s32 64, 64
      %144 = vsyncadd [#allocation12], %s143
      %s146 = sshll.u32 [#allocation11], 4
      %s147 = int_to_ptr.vmem [resolvable:$true] %s146
      %149 = dma.vmem_to_hbm [thread:$0]  %s147, 64, %s17, [#allocation12]
    $region81: #{tpu_custom_call.1} parent=1 // pred_fallthru
      _
    // Predicated region
    $region82: #{tpu_custom_call.1} parent=1 // pred_check
      _
    $region83: #{tpu_custom_call.1} parent=1 // pred_check_branch
      %151 = sbr.rel (0) target = $region85
    $region84: #{tpu_custom_call.1} parent=1 // pred_region
      %s153 = ssub.s32 64, 64
      %154 = vsyncadd [#allocation12], %s153
      %s156 = sshll.u32 [#allocation13], 4
      %s157 = int_to_ptr.vmem [resolvable:$true] %s156
      %159 = dma.vmem_to_hbm [thread:$0]  %s157, 64, %s18, [#allocation12]
    $region85: #{tpu_custom_call.1} parent=1 // pred_fallthru
      _
    // Predicated region
    $region86: #{tpu_custom_call.1} parent=1 // pred_check
      _
    $region87: #{tpu_custom_call.1} parent=1 // pred_check_branch
      %161 = sbr.rel (0) target = $region89
    $region88: #{tpu_custom_call.1} parent=1 // pred_region
      %s163 = ssub.s32 64, 64
      %164 = vsyncadd [#allocation15], %s163
      %s166 = sshll.u32 [#allocation14], 4
      %s167 = int_to_ptr.vmem [resolvable:$true] %s166
      %169 = dma.vmem_to_hbm [thread:$0]  %s167, 64, %s19, [#allocation15]
    $region89: #{tpu_custom_call.1} parent=1 // pred_fallthru
      _
    // Predicated region
    $region90: #{tpu_custom_call.1} parent=1 // pred_check
      _
    $region91: #{tpu_custom_call.1} parent=1 // pred_check_branch
      %171 = sbr.rel (0) target = $region93
    $region92: #{tpu_custom_call.1} parent=1 // pred_region
      %s173 = ssub.s32 64, 64
      %174 = vsyncadd [#allocation15], %s173
      %s176 = sshll.u32 [#allocation16], 4
      %s177 = int_to_ptr.vmem [resolvable:$true] %s176
      %179 = dma.vmem_to_hbm [thread:$0]  %s177, 64, %s20, [#allocation15]
    $region93: #{tpu_custom_call.1} parent=1 // pred_fallthru
      _
    // Predicated region
    $region94: #{tpu_custom_call.1} parent=1 // pred_check
      _
    $region95: #{tpu_custom_call.1} parent=1 // pred_check_branch
      %181 = sbr.rel (0) target = $region97
    $region96: #{tpu_custom_call.1} parent=1 // pred_region
      %182 = dma.done [#allocation4], 64
    $region97: #{tpu_custom_call.1} parent=1 // pred_fallthru
      _
    // Predicated region
    $region98: #{tpu_custom_call.1} parent=1 // pred_check
      _
    $region99: #{tpu_custom_call.1} parent=1 // pred_check_branch
      %184 = sbr.rel (0) target = $region101
    $region100: #{tpu_custom_call.1} parent=1 // pred_region
      %185 = dma.done [#allocation9], 64
    $region101: #{tpu_custom_call.1} parent=1 // pred_fallthru
      _
    // Predicated region
    $region102: #{tpu_custom_call.1} parent=1 // pred_check
      _
    $region103: #{tpu_custom_call.1} parent=1 // pred_check_branch
      %187 = sbr.rel (0) target = $region105
    $region104: #{tpu_custom_call.1} parent=1 // pred_region
      %188 = dma.done [#allocation9], 64
    $region105: #{tpu_custom_call.1} parent=1 // pred_fallthru
      _
    // Predicated region
    $region106: #{tpu_custom_call.1} parent=1 // pred_check
      _
    $region107: #{tpu_custom_call.1} parent=1 // pred_check_branch
      %190 = sbr.rel (0) target = $region109
    $region108: #{tpu_custom_call.1} parent=1 // pred_region
      %191 = dma.done [#allocation12], 64
    $region109: #{tpu_custom_call.1} parent=1 // pred_fallthru
      _
    // Predicated region
    $region110: #{tpu_custom_call.1} parent=1 // pred_check
      _
    $region111: #{tpu_custom_call.1} parent=1 // pred_check_branch
      %193 = sbr.rel (0) target = $region113
    $region112: #{tpu_custom_call.1} parent=1 // pred_region
      %194 = dma.done [#allocation12], 64
    $region113: #{tpu_custom_call.1} parent=1 // pred_fallthru
      _
    // Predicated region
    $region114: #{tpu_custom_call.1} parent=1 // pred_check
      _
    $region115: #{tpu_custom_call.1} parent=1 // pred_check_branch
      %196 = sbr.rel (0) target = $region117
    $region116: #{tpu_custom_call.1} parent=1 // pred_region
      %197 = dma.done [#allocation15], 64
    $region117: #{tpu_custom_call.1} parent=1 // pred_fallthru
      _
    // Predicated region
    $region118: #{tpu_custom_call.1} parent=1 // pred_check
      _
    $region119: #{tpu_custom_call.1} parent=1 // pred_check_branch
      %199 = sbr.rel (0) target = $region121
    $region120: #{tpu_custom_call.1} parent=1 // pred_region
      %200 = dma.done [#allocation15], 64
    $region121: #{tpu_custom_call.1} parent=1 // pred_fallthru
      _
    %201 = vsyncpa [#allocation3], 1
    %202 = vsyncpa [#allocation6], 1
    %203 = vsyncpa [#allocation4], 1
    %204 = vsyncpa [#allocation9], 1
    %205 = vsyncpa [#allocation12], 1
    %206 = vsyncpa [#allocation15], 1

</llo_original>
